<compile_context>
chip_gen: v7x
topology: tpu7x:2x2x1
jax: 0.10.0
libtpu: 0.0.40
codegen_flags: <defaults>
</compile_context>

<pallas_src>
import functools

import jax
import jax.numpy as jnp
from jax.experimental import pallas as pl
from jax.experimental.pallas import tpu as pltpu


def _round_up(n, m):
    return ((n + m - 1) // m) * m


def _cdiv(a, b):
    return (a + b - 1) // b


def _pick_batch_tile(B):
    """Pick the batch tile: minimize tail padding, cap at 1024 rows, give the
    'parallel' batch axis >=2 steps when B is large (v7x dual-TensorCore), and
    prefer multiples of 256 (v6e/v7x MXU M-dim) when it costs no extra padding."""
    MAX_TILE = 1024
    n_tiles = _cdiv(B, MAX_TILE)
    if n_tiles == 1 and B >= 512:
        n_tiles = 2  # let v7x shard the batch across both TensorCores
    tile = _round_up(_cdiv(B, n_tiles), 8)
    if tile >= 256 and tile % 256 != 0:
        t256 = _round_up(tile, 256)
        if _round_up(B, t256) == _round_up(B, tile):
            tile = t256
    return tile


def prepare_params(w1, b1, w2, b2, w3, b3):
    """One-time parameter prep (call at init, NOT per forward):
    zero-pad every feature dim to a multiple of 128 and cast weights to bf16.
    Padded K-columns are provably zero, so downstream reductions stay exact.
    Biases remain f32 (bias add / ReLU run in f32 on the VPU)."""
    in_f, h0 = w1.shape
    h1 = w2.shape[1]
    out_f = w3.shape[1]
    in_p, h0_p, h1_p, out_p = (_round_up(d, 128) for d in (in_f, h0, h1, out_f))
    wdt = jnp.bfloat16
    w1p = jnp.zeros((in_p, h0_p), wdt).at[:in_f, :h0].set(w1.astype(wdt))
    w2p = jnp.zeros((h0_p, h1_p), wdt).at[:h0, :h1].set(w2.astype(wdt))
    w3p = jnp.zeros((h1_p, out_p), wdt).at[:h1, :out_f].set(w3.astype(wdt))
    b1p = jnp.zeros((1, h0_p), jnp.float32).at[:, :h0].set(b1.reshape(1, -1))
    b2p = jnp.zeros((1, h1_p), jnp.float32).at[:, :h1].set(b2.reshape(1, -1))
    b3p = jnp.zeros((1, out_p), jnp.float32).at[:, :out_f].set(b3.reshape(1, -1))
    return (w1p, b1p, w2p, b2p, w3p, b3p)


def _mlp_kernel(x_ref, w1_ref, b1_ref, w2_ref, b2_ref, w3_ref, b3_ref, o_ref):
    """Fused 3-layer MLP tile: relu(relu(x@W1+b1)@W2+b2)@W3+b3.

    x arrives f32 and is cast to bf16 in-kernel (idle VPU slots; avoids an extra
    HBM round-trip for a pre-cast copy). All matmuls accumulate in f32 on the MXU;
    bias add and ReLU stay in f32 on the VPU. All feature dims are pre-padded to
    multiples of 128, so every store is lane-dense (no masked vst)."""
    x = x_ref[...].astype(jnp.bfloat16)                               # (TB, IN)

    # Layer 1: Linear + ReLU
    h = jnp.dot(x, w1_ref[...], preferred_element_type=jnp.float32)  # f32 acc
    h = jnp.maximum(h + b1_ref[...], 0.0)

    # Layer 2: Linear + ReLU
    h = jnp.dot(h.astype(jnp.bfloat16), w2_ref[...],
                preferred_element_type=jnp.float32)
    h = jnp.maximum(h + b2_ref[...], 0.0)

    # Layer 3: final Linear (no activation); store bf16 (lane-dense, half the bytes).
    out = jnp.dot(h.astype(jnp.bfloat16), w3_ref[...],
                  preferred_element_type=jnp.float32)
    o_ref[...] = (out + b3_ref[...]).astype(o_ref.dtype)


@functools.partial(jax.jit, static_argnames=("out_features",))
def fully_connected_forward(x, w1p, b1p, w2p, b2p, w3p, b3p, *, out_features):
    """Pallas forward. x: (B, in_features) f32, params from prepare_params()."""
    B, in_f = x.shape
    in_p, h0_p = w1p.shape
    h1_p = w2p.shape[1]
    out_p = w3p.shape[1]

    batch_tile = _pick_batch_tile(B)
    b_pad = _round_up(B, batch_tile)

    # Aligned fast path: no wrapper copy of x at all.
    if b_pad == B and in_p == in_f:
        x_in = x
    else:
        x_in = jnp.zeros((b_pad, in_p), x.dtype).at[:B, :in_f].set(x)

    grid = (b_pad // batch_tile,)

    x_spec = pl.BlockSpec((batch_tile, in_p), lambda i: (i, 0))
    out_spec = pl.BlockSpec((batch_tile, out_p), lambda i: (i, 0))
    # Weights / biases: full-extent blocks with a constant block index -> DMA'd
    # once, VMEM-resident across the whole batch grid.
    const = lambda shape: pl.BlockSpec(shape, lambda i: (0, 0))

    flops = 2 * b_pad * (in_p * h0_p + h0_p * h1_p + h1_p * out_p)
    bytes_accessed = (
        b_pad * in_p * 4                              # f32 x in
        + (w1p.size + w2p.size + w3p.size) * 2        # bf16 weights
        + (b1p.size + b2p.size + b3p.size) * 4        # f32 biases
        + b_pad * out_p * 2                           # bf16 output
    )

    y_pad = pl.pallas_call(
        _mlp_kernel,
        out_shape=jax.ShapeDtypeStruct((b_pad, out_p), jnp.bfloat16),
        grid=grid,
        in_specs=[
            x_spec,
            const((in_p, h0_p)), const((1, h0_p)),
            const((h0_p, h1_p)), const((1, h1_p)),
            const((h1_p, out_p)), const((1, out_p)),
        ],
        out_specs=out_spec,
        compiler_params=pltpu.CompilerParams(
            dimension_semantics=("parallel",)),
        cost_estimate=pl.CostEstimate(
            flops=flops, transcendentals=0, bytes_accessed=bytes_accessed),
    )(x_in, w1p, b1p, w2p, b2p, w3p, b3p)

    return y_pad[:B, :out_features].astype(jnp.float32)


def init_params(key, in_features, hidden_dims, out_features):
    """Deterministic parameter init (uniform, PyTorch-Linear-style bounds)."""
    dims = [in_features] + list(hidden_dims) + [out_features]
    params = []
    for i in range(len(dims) - 1):
        fan_in, fan_out = dims[i], dims[i + 1]
        key, kw, kb = jax.random.split(key, 3)
        bound = 1.0 / (fan_in ** 0.5)
        w = jax.random.uniform(kw, (fan_in, fan_out), jnp.float32, -bound, bound)
        b = jax.random.uniform(kb, (1, fan_out), jnp.float32, -bound, bound)
        params.extend([w, b])
    return params


if __name__ == "__main__":
    # Small shapes consistent with the module's constructor signature.
    batch = 8
    in_features = 256
    hidden_dims = [128, 64]
    out_features = 12
    # TODO(synk): dropout (p=0.1) is only applied when state=='train'; this kernel
    # implements the eval/test forward pass, so dropout is intentionally omitted.

    key = jax.random.PRNGKey(0)
    key, kx = jax.random.split(key)
    x = jax.random.normal(kx, (batch, in_features), jnp.float32)

    w1, b1, w2, b2, w3, b3 = init_params(key, in_features, hidden_dims, out_features)

    # One-time parameter prep (pad + bf16 cast), hoisted out of the per-call hot path.
    params = jax.block_until_ready(prepare_params(w1, b1, w2, b2, w3, b3))

    y = fully_connected_forward(x, *params, out_features=out_features)
    y = jax.block_until_ready(y)
    assert y.shape == (batch, out_features)

    # Reference 1: same bf16-weight / f32-accumulate math as the kernel (tight;
    # only the final bf16 output rounding differs).
    xb = x.astype(jnp.bfloat16)
    h = jnp.maximum(jnp.dot(xb, w1.astype(jnp.bfloat16),
                            preferred_element_type=jnp.float32) + b1, 0.0)
    h = jnp.maximum(jnp.dot(h.astype(jnp.bfloat16), w2.astype(jnp.bfloat16),
                            preferred_element_type=jnp.float32) + b2, 0.0)
    y_ref_bf16 = jnp.dot(h.astype(jnp.bfloat16), w3.astype(jnp.bfloat16),
                         preferred_element_type=jnp.float32) + b3
    assert jnp.allclose(y, y_ref_bf16, atol=1e-2, rtol=1e-2)

    # Reference 2: full-f32 PyTorch-equivalent forward (loose, bf16 tolerance).
    h = jnp.maximum(x @ w1 + b1, 0.0)
    h = jnp.maximum(h @ w2 + b2, 0.0)
    y_ref_f32 = h @ w3 + b3
    assert jnp.allclose(y, y_ref_f32, atol=5e-2, rtol=5e-2)

    print("KERNEL_OK")
</pallas_src>

<mosaic_0001>
module attributes {stable_mosaic.version = 11 : i64} {
  func.func @_mlp_kernel(%arg0: i32, %arg1: memref<8x256xf32, #tpu.memory_space<vmem>>, %arg2: memref<256x128xbf16, #tpu.memory_space<vmem>>, %arg3: memref<1x128xf32, #tpu.memory_space<vmem>>, %arg4: memref<128x128xbf16, #tpu.memory_space<vmem>>, %arg5: memref<1x128xf32, #tpu.memory_space<vmem>>, %arg6: memref<128x128xbf16, #tpu.memory_space<vmem>>, %arg7: memref<1x128xf32, #tpu.memory_space<vmem>>, %arg8: memref<8x128xbf16, #tpu.memory_space<vmem>>) attributes {dimension_semantics = [#tpu.dimension_semantics<parallel>], iteration_bounds = array<i64: 1>, scalar_prefetch = 0 : i64, scratch_operands = 0 : i64, tpu.core_type = #tpu.core_type<tc>, window_params = [{transform_indices = @transform_0, window_bounds = array<i64: 8, 256>}, {pipeline_mode = #tpu.pipeline_mode<synchronous>, transform_indices = @transform_1, window_bounds = array<i64: 256, 128>}, {pipeline_mode = #tpu.pipeline_mode<synchronous>, transform_indices = @transform_2, window_bounds = array<i64: 1, 128>}, {pipeline_mode = #tpu.pipeline_mode<synchronous>, transform_indices = @transform_3, window_bounds = array<i64: 128, 128>}, {pipeline_mode = #tpu.pipeline_mode<synchronous>, transform_indices = @transform_4, window_bounds = array<i64: 1, 128>}, {pipeline_mode = #tpu.pipeline_mode<synchronous>, transform_indices = @transform_5, window_bounds = array<i64: 128, 128>}, {pipeline_mode = #tpu.pipeline_mode<synchronous>, transform_indices = @transform_6, window_bounds = array<i64: 1, 128>}, {transform_indices = @transform_7, window_bounds = array<i64: 8, 128>}]} {
    %c0 = arith.constant 0 : index
    %c0_0 = arith.constant 0 : index
    %0 = vector.load %arg1[%c0, %c0_0] : memref<8x256xf32, #tpu.memory_space<vmem>>, vector<8x256xf32>
    %1 = arith.truncf %0 : vector<8x256xf32> to vector<8x256xbf16>
    %c0_1 = arith.constant 0 : index
    %c0_2 = arith.constant 0 : index
    %2 = vector.load %arg2[%c0_1, %c0_2] : memref<256x128xbf16, #tpu.memory_space<vmem>>, vector<256x128xbf16>
    %cst = arith.constant dense<0.000000e+00> : vector<8x128xf32>
    %3 = tpu.matmul %1, %2, %cst {dimension_numbers = #tpu.dot_dimension_numbers<[1], [0], [0], [1], [0, 0, 1, 1], [], []>} : vector<8x256xbf16>, vector<256x128xbf16>, vector<8x128xf32> -> vector<8x128xf32>
    %c0_3 = arith.constant 0 : index
    %c0_4 = arith.constant 0 : index
    %4 = vector.load %arg3[%c0_3, %c0_4] : memref<1x128xf32, #tpu.memory_space<vmem>>, vector<1x128xf32>
    %5 = vector.broadcast %4 : vector<1x128xf32> to vector<8x128xf32>
    %6 = arith.addf %3, %5 : vector<8x128xf32>
    %cst_5 = arith.constant 0.000000e+00 : f32
    %7 = vector.broadcast %cst_5 : f32 to vector<8x128xf32>
    %8 = arith.maximumf %6, %7 : vector<8x128xf32>
    %9 = arith.truncf %8 : vector<8x128xf32> to vector<8x128xbf16>
    %c0_6 = arith.constant 0 : index
    %c0_7 = arith.constant 0 : index
    %10 = vector.load %arg4[%c0_6, %c0_7] : memref<128x128xbf16, #tpu.memory_space<vmem>>, vector<128x128xbf16>
    %cst_8 = arith.constant dense<0.000000e+00> : vector<8x128xf32>
    %11 = tpu.matmul %9, %10, %cst_8 {dimension_numbers = #tpu.dot_dimension_numbers<[1], [0], [0], [1], [0, 0, 1, 1], [], []>} : vector<8x128xbf16>, vector<128x128xbf16>, vector<8x128xf32> -> vector<8x128xf32>
    %c0_9 = arith.constant 0 : index
    %c0_10 = arith.constant 0 : index
    %12 = vector.load %arg5[%c0_9, %c0_10] : memref<1x128xf32, #tpu.memory_space<vmem>>, vector<1x128xf32>
    %13 = vector.broadcast %12 : vector<1x128xf32> to vector<8x128xf32>
    %14 = arith.addf %11, %13 : vector<8x128xf32>
    %cst_11 = arith.constant 0.000000e+00 : f32
    %15 = vector.broadcast %cst_11 : f32 to vector<8x128xf32>
    %16 = arith.maximumf %14, %15 : vector<8x128xf32>
    %17 = arith.truncf %16 : vector<8x128xf32> to vector<8x128xbf16>
    %c0_12 = arith.constant 0 : index
    %c0_13 = arith.constant 0 : index
    %18 = vector.load %arg6[%c0_12, %c0_13] : memref<128x128xbf16, #tpu.memory_space<vmem>>, vector<128x128xbf16>
    %cst_14 = arith.constant dense<0.000000e+00> : vector<8x128xf32>
    %19 = tpu.matmul %17, %18, %cst_14 {dimension_numbers = #tpu.dot_dimension_numbers<[1], [0], [0], [1], [0, 0, 1, 1], [], []>} : vector<8x128xbf16>, vector<128x128xbf16>, vector<8x128xf32> -> vector<8x128xf32>
    %c0_15 = arith.constant 0 : index
    %c0_16 = arith.constant 0 : index
    %20 = vector.load %arg7[%c0_15, %c0_16] : memref<1x128xf32, #tpu.memory_space<vmem>>, vector<1x128xf32>
    %21 = vector.broadcast %20 : vector<1x128xf32> to vector<8x128xf32>
    %22 = arith.addf %19, %21 : vector<8x128xf32>
    %23 = arith.truncf %22 : vector<8x128xf32> to vector<8x128xbf16>
    %c0_17 = arith.constant 0 : index
    %c0_18 = arith.constant 0 : index
    %24 = vector.load %arg8[%c0_17, %c0_18] : memref<8x128xbf16, #tpu.memory_space<vmem>>, vector<8x128xbf16>
    tpu.vector_store %arg8[%c0_17, %c0_18], %23 {strides = array<i32>} : memref<8x128xbf16, #tpu.memory_space<vmem>>, vector<8x128xbf16>,
    return
  }
  func.func @transform_0(%arg0: i32) -> (i32, i32) {
    %c0_i32 = arith.constant 0 : i32
    %c0_i32_0 = arith.constant 0 : i32
    return %arg0, %c0_i32 : i32, i32
  }
  func.func @transform_1(%arg0: i32) -> (i32, i32) {
    %c0_i32 = arith.constant 0 : i32
    %c0_i32_0 = arith.constant 0 : i32
    %c0_i32_1 = arith.constant 0 : i32
    return %c0_i32, %c0_i32_0 : i32, i32
  }
  func.func @transform_2(%arg0: i32) -> (i32, i32) {
    %c0_i32 = arith.constant 0 : i32
    %c0_i32_0 = arith.constant 0 : i32
    %c0_i32_1 = arith.constant 0 : i32
    return %c0_i32, %c0_i32_0 : i32, i32
  }
  func.func @transform_3(%arg0: i32) -> (i32, i32) {
    %c0_i32 = arith.constant 0 : i32
    %c0_i32_0 = arith.constant 0 : i32
    %c0_i32_1 = arith.constant 0 : i32
    return %c0_i32, %c0_i32_0 : i32, i32
  }
  func.func @transform_4(%arg0: i32) -> (i32, i32) {
    %c0_i32 = arith.constant 0 : i32
    %c0_i32_0 = arith.constant 0 : i32
    %c0_i32_1 = arith.constant 0 : i32
    return %c0_i32, %c0_i32_0 : i32, i32
  }
  func.func @transform_5(%arg0: i32) -> (i32, i32) {
    %c0_i32 = arith.constant 0 : i32
    %c0_i32_0 = arith.constant 0 : i32
    %c0_i32_1 = arith.constant 0 : i32
    return %c0_i32, %c0_i32_0 : i32, i32
  }
  func.func @transform_6(%arg0: i32) -> (i32, i32) {
    %c0_i32 = arith.constant 0 : i32
    %c0_i32_0 = arith.constant 0 : i32
    %c0_i32_1 = arith.constant 0 : i32
    return %c0_i32, %c0_i32_0 : i32, i32
  }
  func.func @transform_7(%arg0: i32) -> (i32, i32) {
    %c0_i32 = arith.constant 0 : i32
    %c0_i32_0 = arith.constant 0 : i32
    return %arg0, %c0_i32 : i32, i32
  }
}

</mosaic_0001>

<llo_original>
// kernel: fully_connected_forward.1
$region0: #{fully_connected_forward.1}
  #allocation0 [shape = 'u32[]', space=smem, size = 0x4, offset = 0x4, fixed_abs, tag = 'smem constant byte address 0x4 - core index']
  #allocation1 [shape = 'u32[144,128]{1,0:T(1,128)}', space=vmem, size = 0x12000, scoped, tag = 'internal scratch']
  %s0 = inlined_call_operand.hbm [shape: f32[8,256], index: 0, kind: input, shape index: {}]
  %s1 = inlined_call_operand.hbm [shape: bf16[256,128], index: 1, kind: input, shape index: {}]
  %s2 = inlined_call_operand.vmem [shape: f32[1,128], index: 2, kind: input, shape index: {}]
  %s3 = inlined_call_operand.hbm [shape: bf16[128,128], index: 3, kind: input, shape index: {}]
  %s4 = inlined_call_operand.vmem [shape: f32[1,128], index: 4, kind: input, shape index: {}]
  %s5 = inlined_call_operand.hbm [shape: bf16[128,128], index: 5, kind: input, shape index: {}]
  %s6 = inlined_call_operand.vmem [shape: f32[1,128], index: 6, kind: input, shape index: {}]
  %s7 = inlined_call_operand.vmem [shape: bf16[8,128], index: 7, kind: output, shape index: {}]
  %s8 = sld [smem:[#allocation0]]
  $region54: #{fully_connected_forward.1} parent=0
    _
  %s10 = ssub.s32 1, %s8
  %s11 = scalar_select 0, %s10, %s8
  $region1: #{fully_connected_forward.1} parent=0
    #allocation2 [shape = 'u8[8192]{0}', space=vmem, size = 0x2000, scoped, tag = 'input window, operand 0, single buffered']
    #allocation3 [shape = 's32[1]{0}', space=sflag, size = 0x4, scoped, tag = 'scoped memory for fully_connected_forward.1']
    #allocation4 [shape = 'u8[65536]{0}', space=vmem, size = 0x10000, scoped, tag = 'input window, operand 1, single buffered']
    #allocation5 [shape = 's32[1]{0}', space=sflag, size = 0x4, scoped, tag = 'scoped memory for fully_connected_forward.1']
    #allocation6 [shape = 'u8[32768]{0}', space=vmem, size = 0x8000, scoped, tag = 'input window, operand 3, single buffered']
    #allocation7 [shape = 'u8[32768]{0}', space=vmem, size = 0x8000, scoped, tag = 'input window, operand 5, single buffered']
    #allocation8 [shape = 's32[1]{0}', space=sflag, size = 0x4, scoped, tag = 'scoped memory for fully_connected_forward.1']
    %12 = vsyncpa [#allocation3], 0
    %13 = vsyncpa [#allocation5], 0
    %14 = vsyncpa [#allocation8], 0
    // Predicated region
    $region2: #{fully_connected_forward.1} parent=1 // pred_check
      _
    $region3: #{fully_connected_forward.1} parent=1 // pred_check_branch
      %16 = sbr.rel (0) target = $region5
    $region4: #{fully_connected_forward.1} parent=1 // pred_region
      %s18 = ssub.s32 256, 256
      %19 = vsyncadd [#allocation3], %s18
      %s21 = sshll.u32 [#allocation2], 4
      %s22 = int_to_ptr.vmem [resolvable:$true] %s21
      %24 = dma.hbm_to_vmem [thread:$0]  %s0, 256, %s22, [#allocation3]
    $region5: #{fully_connected_forward.1} parent=1 // pred_fallthru
      _
    // Predicated region
    $region6: #{fully_connected_forward.1} parent=1 // pred_check
      _
    $region7: #{fully_connected_forward.1} parent=1 // pred_check_branch
      %26 = sbr.rel (0) target = $region9
    $region8: #{fully_connected_forward.1} parent=1 // pred_region
      %s28 = ssub.s32 2048, 2048
      %29 = vsyncadd [#allocation5], %s28
      %s30 = sshll.u32 [#allocation4], 4
      %s31 = int_to_ptr.vmem [resolvable:$true] %s30
      %36 = dma.hbm_to_vmem [thread:$0]  %s1, 2048, %s31, [#allocation5], 64, 64, 4
    $region9: #{fully_connected_forward.1} parent=1 // pred_fallthru
      _
    // Predicated region
    $region10: #{fully_connected_forward.1} parent=1 // pred_check
      _
    $region11: #{fully_connected_forward.1} parent=1 // pred_check_branch
      %38 = sbr.rel (0) target = $region13
    $region12: #{fully_connected_forward.1} parent=1 // pred_region
      _
    $region13: #{fully_connected_forward.1} parent=1 // pred_fallthru
      _
    // Predicated region
    $region14: #{fully_connected_forward.1} parent=1 // pred_check
      _
    $region15: #{fully_connected_forward.1} parent=1 // pred_check_branch
      %40 = sbr.rel (0) target = $region17
    $region16: #{fully_connected_forward.1} parent=1 // pred_region
      %s42 = ssub.s32 1024, 1024
      %43 = vsyncadd [#allocation5], %s42
      %s44 = sshll.u32 [#allocation6], 4
      %s45 = int_to_ptr.vmem [resolvable:$true] %s44
      %50 = dma.hbm_to_vmem [thread:$0]  %s3, 1024, %s45, [#allocation5], 64, 64, 4
    $region17: #{fully_connected_forward.1} parent=1 // pred_fallthru
      _
    // Predicated region
    $region18: #{fully_connected_forward.1} parent=1 // pred_check
      _
    $region19: #{fully_connected_forward.1} parent=1 // pred_check_branch
      %52 = sbr.rel (0) target = $region21
    $region20: #{fully_connected_forward.1} parent=1 // pred_region
      _
    $region21: #{fully_connected_forward.1} parent=1 // pred_fallthru
      _
    // Predicated region
    $region22: #{fully_connected_forward.1} parent=1 // pred_check
      _
    $region23: #{fully_connected_forward.1} parent=1 // pred_check_branch
      %54 = sbr.rel (0) target = $region25
    $region24: #{fully_connected_forward.1} parent=1 // pred_region
      %s56 = ssub.s32 1024, 1024
      %57 = vsyncadd [#allocation8], %s56
      %s58 = sshll.u32 [#allocation7], 4
      %s59 = int_to_ptr.vmem [resolvable:$true] %s58
      %64 = dma.hbm_to_vmem [thread:$0]  %s5, 1024, %s59, [#allocation8], 64, 64, 4
    $region25: #{fully_connected_forward.1} parent=1 // pred_fallthru
      _
    // Predicated region
    $region26: #{fully_connected_forward.1} parent=1 // pred_check
      _
    $region27: #{fully_connected_forward.1} parent=1 // pred_check_branch
      %66 = sbr.rel (0) target = $region29
    $region28: #{fully_connected_forward.1} parent=1 // pred_region
      _
    $region29: #{fully_connected_forward.1} parent=1 // pred_fallthru
      _
    // Predicated region
    $region30: #{fully_connected_forward.1} parent=1 // pred_check
      _
    $region31: #{fully_connected_forward.1} parent=1 // pred_check_branch
      %68 = sbr.rel (0) target = $region33
    $region32: #{fully_connected_forward.1} parent=1 // pred_region
      %69 = dma.done [#allocation3], 256
    $region33: #{fully_connected_forward.1} parent=1 // pred_fallthru
      _
    // Predicated region
    $region34: #{fully_connected_forward.1} parent=1 // pred_check
      _
    $region35: #{fully_connected_forward.1} parent=1 // pred_check_branch
      %71 = sbr.rel (0) target = $region37
    $region36: #{fully_connected_forward.1} parent=1 // pred_region
      %72 = dma.done [#allocation5], 2048
    $region37: #{fully_connected_forward.1} parent=1 // pred_fallthru
      _
    // Predicated region
    $region38: #{fully_connected_forward.1} parent=1 // pred_check
      _
    $region39: #{fully_connected_forward.1} parent=1 // pred_check_branch
      %74 = sbr.rel (0) target = $region41
    $region40: #{fully_connected_forward.1} parent=1 // pred_region
      %75 = dma.done [#allocation5], 1024
    $region41: #{fully_connected_forward.1} parent=1 // pred_fallthru
      _
    // Predicated region
    $region42: #{fully_connected_forward.1} parent=1 // pred_check
      _
    $region43: #{fully_connected_forward.1} parent=1 // pred_check_branch
      %77 = sbr.rel (0) target = $region45
    $region44: #{fully_connected_forward.1} parent=1 // pred_region
      %78 = dma.done [#allocation8], 1024
    $region45: #{fully_connected_forward.1} parent=1 // pred_fallthru
      _
    %v80 = vld [vmem:[#allocation2] sm:$0xff]
    %v81 = vld [vmem:[#allocation2 + $0x8] sm:$0xff]
    %v82 = vpack.c.bf16 %v80, %v80
    %v83 = vpack.c.bf16 %v81, %v81
    %v84 = vld [vmem:[#allocation4] sm:$0xf]
    %v85 = vld [vmem:[#allocation4 + $0x4] sm:$0xf]
    %v86 = vld [vmem:[#allocation4 + $0x8] sm:$0xf]
    %v87 = vld [vmem:[#allocation4 + $0xc] sm:$0xf]
    %v88 = vld [vmem:[#allocation4 + $0x10] sm:$0xf]
    %v89 = vld [vmem:[#allocation4 + $0x14] sm:$0xf]
    %v90 = vld [vmem:[#allocation4 + $0x18] sm:$0xf]
    %v91 = vld [vmem:[#allocation4 + $0x1c] sm:$0xf]
    %v92 = vld [vmem:[#allocation4 + $0x20] sm:$0xf]
    %v93 = vld [vmem:[#allocation4 + $0x24] sm:$0xf]
    %v94 = vld [vmem:[#allocation4 + $0x28] sm:$0xf]
    %v95 = vld [vmem:[#allocation4 + $0x2c] sm:$0xf]
    %v96 = vld [vmem:[#allocation4 + $0x30] sm:$0xf]
    %v97 = vld [vmem:[#allocation4 + $0x34] sm:$0xf]
    %v98 = vld [vmem:[#allocation4 + $0x38] sm:$0xf]
    %v99 = vld [vmem:[#allocation4 + $0x3c] sm:$0xf]
    %v100 = vld [vmem:[#allocation4 + $0x40] sm:$0xf]
    %v101 = vld [vmem:[#allocation4 + $0x44] sm:$0xf]
    %v102 = vld [vmem:[#allocation4 + $0x48] sm:$0xf]
    %v103 = vld [vmem:[#allocation4 + $0x4c] sm:$0xf]
    %v104 = vld [vmem:[#allocation4 + $0x50] sm:$0xf]
    %v105 = vld [vmem:[#allocation4 + $0x54] sm:$0xf]
    %v106 = vld [vmem:[#allocation4 + $0x58] sm:$0xf]
    %v107 = vld [vmem:[#allocation4 + $0x5c] sm:$0xf]
    %v108 = vld [vmem:[#allocation4 + $0x60] sm:$0xf]
    %v109 = vld [vmem:[#allocation4 + $0x64] sm:$0xf]
    %v110 = vld [vmem:[#allocation4 + $0x68] sm:$0xf]
    %v111 = vld [vmem:[#allocation4 + $0x6c] sm:$0xf]
    %v112 = vld [vmem:[#allocation4 + $0x70] sm:$0xf]
    %v113 = vld [vmem:[#allocation4 + $0x74] sm:$0xf]
    %v114 = vld [vmem:[#allocation4 + $0x78] sm:$0xf]
    %v115 = vld [vmem:[#allocation4 + $0x7c] sm:$0xf]
    %v116 = vld [vmem:[%s2] sm:$0x1]
    %v118 = vlaneseq
    %v119 = vshrl.u32 %v118, 7
    %v120 = vsub.s32 0, %v119
    %v121 = vrot.slane %v116, %v120
    %v155 = vunpack.c.l.b16 %v84
    %v156 = vunpack.c.l.b16 %v85
    %v157 = vunpack.c.l.b16 %v86
    %v158 = vunpack.c.l.b16 %v87
    %v159 = vunpack.c.l.b16 %v88
    %v160 = vunpack.c.l.b16 %v89
    %v161 = vunpack.c.l.b16 %v90
    %v162 = vunpack.c.l.b16 %v91
    %v163 = vunpack.c.l.b16 %v92
    %v164 = vunpack.c.l.b16 %v93
    %v165 = vunpack.c.l.b16 %v94
    %v166 = vunpack.c.l.b16 %v95
    %v167 = vunpack.c.l.b16 %v96
    %v168 = vunpack.c.l.b16 %v97
    %v169 = vunpack.c.l.b16 %v98
    %v170 = vunpack.c.l.b16 %v99
    %v171 = vunpack.c.l.b16 %v100
    %v172 = vunpack.c.l.b16 %v101
    %v173 = vunpack.c.l.b16 %v102
    %v174 = vunpack.c.l.b16 %v103
    %v175 = vunpack.c.l.b16 %v104
    %v176 = vunpack.c.l.b16 %v105
    %v177 = vunpack.c.l.b16 %v106
    %v178 = vunpack.c.l.b16 %v107
    %v179 = vunpack.c.l.b16 %v108
    %v180 = vunpack.c.l.b16 %v109
    %v181 = vunpack.c.l.b16 %v110
    %v182 = vunpack.c.l.b16 %v111
    %v183 = vunpack.c.l.b16 %v112
    %v184 = vunpack.c.l.b16 %v113
    %v185 = vunpack.c.l.b16 %v114
    %v186 = vunpack.c.l.b16 %v115
    %v187 = vpack.c.b16 %v156, %v155
    %v188 = vpack.c.b16 %v158, %v157
    %v189 = vpack.c.b16 %v160, %v159
    %v190 = vpack.c.b16 %v162, %v161
    %v191 = vpack.c.b16 %v164, %v163
    %v192 = vpack.c.b16 %v166, %v165
    %v193 = vpack.c.b16 %v168, %v167
    %v194 = vpack.c.b16 %v170, %v169
    %v195 = vpack.c.b16 %v172, %v171
    %v196 = vpack.c.b16 %v174, %v173
    %v197 = vpack.c.b16 %v176, %v175
    %v198 = vpack.c.b16 %v178, %v177
    %v199 = vpack.c.b16 %v180, %v179
    %v200 = vpack.c.b16 %v182, %v181
    %v201 = vpack.c.b16 %v184, %v183
    %v202 = vpack.c.b16 %v186, %v185
    %219 = vmatprep.subr.bf16.mxu0 0
    %220 = vmatpush1.bf16.msra.mxu0 %v187
    %221 = vmatprep.subr.bf16.mxu0 0
    %222 = vmatpush1.bf16.msra.mxu0 %v188
    %223 = vmatprep.subr.bf16.mxu0 0
    %224 = vmatpush1.bf16.msra.mxu0 %v189
    %225 = vmatprep.subr.bf16.mxu0 0
    %226 = vmatpush1.bf16.msra.mxu0 %v190
    %227 = vmatprep.subr.bf16.mxu0 0
    %228 = vmatpush1.bf16.msra.mxu0 %v191
    %229 = vmatprep.subr.bf16.mxu0 0
    %230 = vmatpush1.bf16.msra.mxu0 %v192
    %231 = vmatprep.subr.bf16.mxu0 0
    %232 = vmatpush1.bf16.msra.mxu0 %v193
    %233 = vmatprep.subr.bf16.mxu0 0
    %234 = vmatpush1.bf16.msra.mxu0 %v194
    %235 = vmatprep.subr.bf16.mxu0 0
    %236 = vmatpush1.bf16.msra.mxu0 %v195
    %237 = vmatprep.subr.bf16.mxu0 0
    %238 = vmatpush1.bf16.msra.mxu0 %v196
    %239 = vmatprep.subr.bf16.mxu0 0
    %240 = vmatpush1.bf16.msra.mxu0 %v197
    %241 = vmatprep.subr.bf16.mxu0 0
    %242 = vmatpush1.bf16.msra.mxu0 %v198
    %243 = vmatprep.subr.bf16.mxu0 0
    %244 = vmatpush1.bf16.msra.mxu0 %v199
    %245 = vmatprep.subr.bf16.mxu0 0
    %246 = vmatpush1.bf16.msra.mxu0 %v200
    %247 = vmatprep.subr.bf16.mxu0 0
    %248 = vmatpush1.bf16.msra.mxu0 %v201
    %249 = vmatprep.subr.bf16.mxu0 0
    %250 = vmatpush1.bf16.msra.mxu0 %v202
    %251 = vmatprep.mubr.bf16.mxu0 %v83
    %252 = vmatmul.mubr.bf16.gmra.mrb[0].mxu0 %v82
    %v253 = vpop.f32.mrb[0].mxu0
    %v254 = vadd.f32 %v121, %v253
    %v255 = vpop.f32.mrb[0].mxu0
    %v256 = vpop.f32.mrb[0].mxu0
    %v257 = vpop.f32.mrb[0].mxu0
    %258 = vdwg.mxu0
    %v259 = vmax.f32 %v254, 0.0
    %v260 = vpack.c.bf16 %v259, %v259
    %v261 = vld [vmem:[#allocation6] sm:$0xf]
    %v262 = vld [vmem:[#allocation6 + $0x4] sm:$0xf]
    %v263 = vld [vmem:[#allocation6 + $0x8] sm:$0xf]
    %v264 = vld [vmem:[#allocation6 + $0xc] sm:$0xf]
    %v265 = vld [vmem:[#allocation6 + $0x10] sm:$0xf]
    %v266 = vld [vmem:[#allocation6 + $0x14] sm:$0xf]
    %v267 = vld [vmem:[#allocation6 + $0x18] sm:$0xf]
    %v268 = vld [vmem:[#allocation6 + $0x1c] sm:$0xf]
    %v269 = vld [vmem:[#allocation6 + $0x20] sm:$0xf]
    %v270 = vld [vmem:[#allocation6 + $0x24] sm:$0xf]
    %v271 = vld [vmem:[#allocation6 + $0x28] sm:$0xf]
    %v272 = vld [vmem:[#allocation6 + $0x2c] sm:$0xf]
    %v273 = vld [vmem:[#allocation6 + $0x30] sm:$0xf]
    %v274 = vld [vmem:[#allocation6 + $0x34] sm:$0xf]
    %v275 = vld [vmem:[#allocation6 + $0x38] sm:$0xf]
    %v276 = vld [vmem:[#allocation6 + $0x3c] sm:$0xf]
    %v277 = vld [vmem:[%s4] sm:$0x1]
    %v279 = vlaneseq
    %v280 = vshrl.u32 %v279, 7
    %v281 = vsub.s32 0, %v280
    %v282 = vrot.slane %v277, %v281
    %v300 = vunpack.c.l.b16 %v261
    %v301 = vunpack.c.l.b16 %v262
    %v302 = vunpack.c.l.b16 %v263
    %v303 = vunpack.c.l.b16 %v264
    %v304 = vunpack.c.l.b16 %v265
    %v305 = vunpack.c.l.b16 %v266
    %v306 = vunpack.c.l.b16 %v267
    %v307 = vunpack.c.l.b16 %v268
    %v308 = vunpack.c.l.b16 %v269
    %v309 = vunpack.c.l.b16 %v270
    %v310 = vunpack.c.l.b16 %v271
    %v311 = vunpack.c.l.b16 %v272
    %v312 = vunpack.c.l.b16 %v273
    %v313 = vunpack.c.l.b16 %v274
    %v314 = vunpack.c.l.b16 %v275
    %v315 = vunpack.c.l.b16 %v276
    %v316 = vpack.c.b16 %v301, %v300
    %v317 = vpack.c.b16 %v303, %v302
    %v318 = vpack.c.b16 %v305, %v304
    %v319 = vpack.c.b16 %v307, %v306
    %v320 = vpack.c.b16 %v309, %v308
    %v321 = vpack.c.b16 %v311, %v310
    %v322 = vpack.c.b16 %v313, %v312
    %v323 = vpack.c.b16 %v315, %v314
    %332 = vmatprep.subr.bf16.mxu0 0
    %333 = vmatpush1.bf16.msra.mxu0 %v316
    %334 = vmatprep.subr.bf16.mxu0 0
    %335 = vmatpush1.bf16.msra.mxu0 %v317
    %336 = vmatprep.subr.bf16.mxu0 0
    %337 = vmatpush1.bf16.msra.mxu0 %v318
    %338 = vmatprep.subr.bf16.mxu0 0
    %339 = vmatpush1.bf16.msra.mxu0 %v319
    %340 = vmatprep.subr.bf16.mxu0 0
    %341 = vmatpush1.bf16.msra.mxu0 %v320
    %342 = vmatprep.subr.bf16.mxu0 0
    %343 = vmatpush1.bf16.msra.mxu0 %v321
    %344 = vmatprep.subr.bf16.mxu0 0
    %345 = vmatpush1.bf16.msra.mxu0 %v322
    %346 = vmatprep.subr.bf16.mxu0 0
    %347 = vmatpush1.bf16.msra.mxu0 %v323
    %348 = vmatprep.subr.bf16.mxu0 0
    %349 = vmatpush1.bf16.msra.mxu0 0
    %350 = vmatprep.subr.bf16.mxu0 0
    %351 = vmatpush1.bf16.msra.mxu0 0
    %352 = vmatprep.subr.bf16.mxu0 0
    %353 = vmatpush1.bf16.msra.mxu0 0
    %354 = vmatprep.subr.bf16.mxu0 0
    %355 = vmatpush1.bf16.msra.mxu0 0
    %356 = vmatprep.subr.bf16.mxu0 0
    %357 = vmatpush1.bf16.msra.mxu0 0
    %358 = vmatprep.subr.bf16.mxu0 0
    %359 = vmatpush1.bf16.msra.mxu0 0
    %360 = vmatprep.subr.bf16.mxu0 0
    %361 = vmatpush1.bf16.msra.mxu0 0
    %362 = vmatprep.subr.bf16.mxu0 0
    %363 = vmatpush1.bf16.msra.mxu0 0
    %364 = vmatprep.mubr.bf16.mxu0 0
    %365 = vmatmul.mubr.bf16.gmra.mrb[0].mxu0 %v260
    %v366 = vpop.f32.mrb[0].mxu0
    %v367 = vadd.f32 %v282, %v366
    %v368 = vpop.f32.mrb[0].mxu0
    %v369 = vpop.f32.mrb[0].mxu0
    %v370 = vpop.f32.mrb[0].mxu0
    %371 = vdwg.mxu0
    %v372 = vmax.f32 %v367, 0.0
    %v373 = vpack.c.bf16 %v372, %v372
    %v374 = vld [vmem:[#allocation7] sm:$0xf]
    %v375 = vld [vmem:[#allocation7 + $0x4] sm:$0xf]
    %v376 = vld [vmem:[#allocation7 + $0x8] sm:$0xf]
    %v377 = vld [vmem:[#allocation7 + $0xc] sm:$0xf]
    %v378 = vld [vmem:[#allocation7 + $0x10] sm:$0xf]
    %v379 = vld [vmem:[#allocation7 + $0x14] sm:$0xf]
    %v380 = vld [vmem:[#allocation7 + $0x18] sm:$0xf]
    %v381 = vld [vmem:[#allocation7 + $0x1c] sm:$0xf]
    %v382 = vld [vmem:[#allocation7 + $0x20] sm:$0xf]
    %v383 = vld [vmem:[#allocation7 + $0x24] sm:$0xf]
    %v384 = vld [vmem:[#allocation7 + $0x28] sm:$0xf]
    %v385 = vld [vmem:[#allocation7 + $0x2c] sm:$0xf]
    %v386 = vld [vmem:[#allocation7 + $0x30] sm:$0xf]
    %v387 = vld [vmem:[#allocation7 + $0x34] sm:$0xf]
    %v388 = vld [vmem:[#allocation7 + $0x38] sm:$0xf]
    %v389 = vld [vmem:[#allocation7 + $0x3c] sm:$0xf]
    %v390 = vld [vmem:[%s6] sm:$0x1]
    %v392 = vlaneseq
    %v393 = vshrl.u32 %v392, 7
    %v394 = vsub.s32 0, %v393
    %v395 = vrot.slane %v390, %v394
    %v413 = vunpack.c.l.b16 %v374
    %v414 = vunpack.c.l.b16 %v375
    %v415 = vunpack.c.l.b16 %v376
    %v416 = vunpack.c.l.b16 %v377
    %v417 = vunpack.c.l.b16 %v378
    %v418 = vunpack.c.l.b16 %v379
    %v419 = vunpack.c.l.b16 %v380
    %v420 = vunpack.c.l.b16 %v381
    %v421 = vunpack.c.l.b16 %v382
    %v422 = vunpack.c.l.b16 %v383
    %v423 = vunpack.c.l.b16 %v384
    %v424 = vunpack.c.l.b16 %v385
    %v425 = vunpack.c.l.b16 %v386
    %v426 = vunpack.c.l.b16 %v387
    %v427 = vunpack.c.l.b16 %v388
    %v428 = vunpack.c.l.b16 %v389
    %v429 = vpack.c.b16 %v414, %v413
    %v430 = vpack.c.b16 %v416, %v415
    %v431 = vpack.c.b16 %v418, %v417
    %v432 = vpack.c.b16 %v420, %v419
    %v433 = vpack.c.b16 %v422, %v421
    %v434 = vpack.c.b16 %v424, %v423
    %v435 = vpack.c.b16 %v426, %v425
    %v436 = vpack.c.b16 %v428, %v427
    %445 = vmatprep.subr.bf16.mxu0 0
    %446 = vmatpush1.bf16.msra.mxu0 %v429
    %447 = vmatprep.subr.bf16.mxu0 0
    %448 = vmatpush1.bf16.msra.mxu0 %v430
    %449 = vmatprep.subr.bf16.mxu0 0
    %450 = vmatpush1.bf16.msra.mxu0 %v431
    %451 = vmatprep.subr.bf16.mxu0 0
    %452 = vmatpush1.bf16.msra.mxu0 %v432
    %453 = vmatprep.subr.bf16.mxu0 0
    %454 = vmatpush1.bf16.msra.mxu0 %v433
    %455 = vmatprep.subr.bf16.mxu0 0
    %456 = vmatpush1.bf16.msra.mxu0 %v434
    %457 = vmatprep.subr.bf16.mxu0 0
    %458 = vmatpush1.bf16.msra.mxu0 %v435
    %459 = vmatprep.subr.bf16.mxu0 0
    %460 = vmatpush1.bf16.msra.mxu0 %v436
    %461 = vmatprep.subr.bf16.mxu0 0
    %462 = vmatpush1.bf16.msra.mxu0 0
    %463 = vmatprep.subr.bf16.mxu0 0
    %464 = vmatpush1.bf16.msra.mxu0 0
    %465 = vmatprep.subr.bf16.mxu0 0
    %466 = vmatpush1.bf16.msra.mxu0 0
    %467 = vmatprep.subr.bf16.mxu0 0
    %468 = vmatpush1.bf16.msra.mxu0 0
    %469 = vmatprep.subr.bf16.mxu0 0
    %470 = vmatpush1.bf16.msra.mxu0 0
    %471 = vmatprep.subr.bf16.mxu0 0
    %472 = vmatpush1.bf16.msra.mxu0 0
    %473 = vmatprep.subr.bf16.mxu0 0
    %474 = vmatpush1.bf16.msra.mxu0 0
    %475 = vmatprep.subr.bf16.mxu0 0
    %476 = vmatpush1.bf16.msra.mxu0 0
    %477 = vmatprep.mubr.bf16.mxu0 0
    %478 = vmatmul.mubr.bf16.gmra.mrb[0].mxu0 %v373
    %v479 = vpop.f32.mrb[0].mxu0
    %v480 = vadd.f32 %v395, %v479
    %v481 = vpop.f32.mrb[0].mxu0
    %v482 = vpop.f32.mrb[0].mxu0
    %v483 = vpop.f32.mrb[0].mxu0
    %484 = vdwg.mxu0
    %v485 = vpack.c.bf16 %v480, %v480
    %486 = vst [vmem:[%s7] sm:$0xf] %v485
    // Predicated region
    $region46: #{fully_connected_forward.1} parent=1 // pred_check
      _
    $region47: #{fully_connected_forward.1} parent=1 // pred_check_branch
      %488 = sbr.rel (0) target = $region49
    $region48: #{fully_connected_forward.1} parent=1 // pred_region
      _
    $region49: #{fully_connected_forward.1} parent=1 // pred_fallthru
      _
    // Predicated region
    $region50: #{fully_connected_forward.1} parent=1 // pred_check
      _
    $region51: #{fully_connected_forward.1} parent=1 // pred_check_branch
      %490 = sbr.rel (0) target = $region53
    $region52: #{fully_connected_forward.1} parent=1 // pred_region
      _
    $region53: #{fully_connected_forward.1} parent=1 // pred_fallthru
      _
    %491 = vsyncpa [#allocation3], 1
    %492 = vsyncpa [#allocation5], 1
    %493 = vsyncpa [#allocation8], 1

</llo_original>
